<compile_context>
chip_gen: v7x
topology: tpu7x:2x2x1
jax: 0.10.0
libtpu: 0.0.40
codegen_flags: <defaults>
</compile_context>

<pallas_src>
import jax
import jax.numpy as jnp
from jax.experimental import pallas as pl
from jax.experimental.pallas import tpu as pltpu

_LANES = 128
_SMALL_LIMIT_BYTES = 4 << 20      # whole-array-in-VMEM path threshold (per buffer)
_TARGET_BLOCK_BYTES = 2 << 20     # large-path tile size (per buffer)


def _floor_kernel(x_ref, o_ref):
    o_ref[...] = jnp.floor(x_ref[...])


def floor_pallas(x: jax.Array) -> jax.Array:
    """Elementwise floor via a Pallas TPU kernel. Works for any shape / float dtype."""
    orig_shape = x.shape
    dtype = x.dtype
    n = x.size
    itemsize = jnp.dtype(dtype).itemsize
    # Native sublane packing: 8 rows f32, 16 rows bf16, 32 rows int8/fp8.
    sublanes = max(8, 32 // itemsize)

    total_bytes = n * itemsize

    # ---------------- Small path: one ungridded block, whole array in VMEM ----
    if total_bytes <= _SMALL_LIMIT_BYTES:
        if n % _LANES == 0:
            # Lane-dense (rows, 128) slab -> fully unmasked vector stores.
            rows = n // _LANES
            x2d = x.reshape(rows, _LANES)
            out2d = pl.pallas_call(
                _floor_kernel,
                out_shape=jax.ShapeDtypeStruct((rows, _LANES), dtype),
            )(x2d)
            return out2d.reshape(orig_shape)
        # Not lane-aligned: pass as-is (full-extent block, masked edge stores)
        # — still cheaper than an HBM pad + slice round trip at this size.
        return pl.pallas_call(
            _floor_kernel,
            out_shape=jax.ShapeDtypeStruct(orig_shape, dtype),
        )(x)

    # ---------------- Large path: pipelined ~2 MiB row tiles ------------------
    if n % _LANES == 0:
        rows = n // _LANES
        flat = x.reshape(rows, _LANES)
        cropped = False
    else:
        granule = _LANES * sublanes
        padded = pl.cdiv(n, granule) * granule
        flat = jnp.pad(x.reshape(-1), (0, padded - n)).reshape(padded // _LANES, _LANES)
        rows = padded // _LANES
        cropped = True

    block_rows = max(sublanes, _TARGET_BLOCK_BYTES // (_LANES * itemsize))
    block_rows = (block_rows // sublanes) * sublanes
    block_rows = min(block_rows, rows)
    # Guarantee >= 2 grid steps so the "parallel" axis can shard across cores.
    if pl.cdiv(rows, block_rows) < 2:
        half = ((rows + 1) // 2 + sublanes - 1) // sublanes * sublanes
        block_rows = max(sublanes, half)
    grid = (pl.cdiv(rows, block_rows),)

    out2d = pl.pallas_call(
        _floor_kernel,
        out_shape=jax.ShapeDtypeStruct((rows, _LANES), dtype),
        grid=grid,
        in_specs=[pl.BlockSpec((block_rows, _LANES), lambda i: (i, 0))],
        out_specs=pl.BlockSpec((block_rows, _LANES), lambda i: (i, 0)),
        compiler_params=pltpu.CompilerParams(
            dimension_semantics=("parallel",),
        ),
    )(flat)

    if cropped:
        return out2d.reshape(-1)[:n].reshape(orig_shape)
    return out2d.reshape(orig_shape)


if __name__ == "__main__":
    key = jax.random.PRNGKey(0)

    # Primary test: small NCHW tensor matching the module's expected input.
    x = jax.random.normal(key, (2, 4, 16, 16), dtype=jnp.float32) * 5.0
    y = floor_pallas(x)
    jax.block_until_ready(y)
    y_ref = jnp.floor(x)
    assert y.shape == x.shape and y.dtype == x.dtype
    assert bool(jnp.all(y == y_ref))

    # Secondary test: exercise the tiled (large-input) path as well.
    key2 = jax.random.PRNGKey(1)
    x_big = jax.random.normal(key2, (2048, 1536), dtype=jnp.float32) * 7.0
    y_big = floor_pallas(x_big)
    jax.block_until_ready(y_big)
    assert bool(jnp.all(y_big == jnp.floor(x_big)))

    # Tertiary test: small, non-128-aligned shape hits the pad-free small path.
    key3 = jax.random.PRNGKey(2)
    x_odd = jax.random.normal(key3, (3, 5, 7), dtype=jnp.float32) * 3.0
    y_odd = floor_pallas(x_odd)
    jax.block_until_ready(y_odd)
    assert bool(jnp.all(y_odd == jnp.floor(x_odd)))

    print("KERNEL_OK")
</pallas_src>

<mosaic_0001>
module attributes {stable_mosaic.version = 11 : i64} {
  func.func @_floor_kernel(%arg0: memref<16x128xf32, #tpu.memory_space<vmem>>, %arg1: memref<16x128xf32, #tpu.memory_space<vmem>>) attributes {dimension_semantics = [], scalar_prefetch = 0 : i64, scratch_operands = 0 : i64, tpu.core_type = #tpu.core_type<tc>} {
    %c0 = arith.constant 0 : index
    %c0_0 = arith.constant 0 : index
    %0 = vector.load %arg0[%c0, %c0_0] : memref<16x128xf32, #tpu.memory_space<vmem>>, vector<16x128xf32>
    %1 = math.floor %0 : vector<16x128xf32>
    %c0_1 = arith.constant 0 : index
    %c0_2 = arith.constant 0 : index
    %2 = vector.load %arg1[%c0_1, %c0_2] : memref<16x128xf32, #tpu.memory_space<vmem>>, vector<16x128xf32>
    tpu.vector_store %arg1[%c0_1, %c0_2], %1 {strides = array<i32>} : memref<16x128xf32, #tpu.memory_space<vmem>>, vector<16x128xf32>,
    return
  }
}

</mosaic_0001>

<llo_original>
// kernel: tpu_custom_call.1
$region0: #{tpu_custom_call.1}
  #allocation0 [shape = 'u32[]', space=smem, size = 0x4, offset = 0x4, fixed_abs, tag = 'smem constant byte address 0x4 - core index']
  #allocation1 [shape = 'u32[144,128]{1,0:T(1,128)}', space=vmem, size = 0x12000, scoped, tag = 'internal scratch']
  %s0 = inlined_call_operand.hbm [shape: f32[16,128], index: 0, kind: input, shape index: {}]
  %s1 = inlined_call_operand.hbm [shape: f32[16,128], index: 1, kind: output, shape index: {}]
  %s2 = sld [smem:[#allocation0]]
  $region18: #{tpu_custom_call.1} parent=0
    _
  %s4 = ssub.s32 1, %s2
  %s5 = scalar_select 0, %s4, %s2
  $region1: #{tpu_custom_call.1} parent=0
    #allocation2 [shape = 'u8[8192]{0}', space=vmem, size = 0x2000, scoped, tag = 'input window, operand 0, single buffered']
    #allocation3 [shape = 's32[1]{0}', space=sflag, size = 0x4, scoped, tag = 'scoped memory for tpu_custom_call.1']
    #allocation4 [shape = 's32[1]{0}', space=sflag, size = 0x4, scoped, tag = 'scoped memory for tpu_custom_call.1']
    #allocation5 [shape = 'u8[8192]{0}', space=vmem, size = 0x2000, scoped, tag = 'output window, operand 0, single buffered']
    %6 = vsyncpa [#allocation3], 0
    %7 = vsyncpa [#allocation4], 0
    // Predicated region
    $region2: #{tpu_custom_call.1} parent=1 // pred_check
      _
    $region3: #{tpu_custom_call.1} parent=1 // pred_check_branch
      %9 = sbr.rel (0) target = $region5
    $region4: #{tpu_custom_call.1} parent=1 // pred_region
      %s11 = ssub.s32 256, 256
      %12 = vsyncadd [#allocation3], %s11
      %s13 = sshll.u32 [#allocation2], 4
      %s14 = int_to_ptr.vmem [resolvable:$true] %s13
      %19 = dma.hbm_to_vmem [thread:$0]  %s0, 256, %s14, [#allocation3], 128, 128, 8
    $region5: #{tpu_custom_call.1} parent=1 // pred_fallthru
      _
    // Predicated region
    $region6: #{tpu_custom_call.1} parent=1 // pred_check
      _
    $region7: #{tpu_custom_call.1} parent=1 // pred_check_branch
      %21 = sbr.rel (0) target = $region9
    $region8: #{tpu_custom_call.1} parent=1 // pred_region
      %22 = dma.done [#allocation3], 256
    $region9: #{tpu_custom_call.1} parent=1 // pred_fallthru
      _
    %v23 = vld [vmem:[#allocation2] sm:$0xff]
    %v24 = vld [vmem:[#allocation2 + $0x8] sm:$0xff]
    %v25 = vfloor.f32 %v23
    %v26 = vfloor.f32 %v24
    %27 = vst [vmem:[#allocation5] sm:$0xff] %v25
    %28 = vst [vmem:[#allocation5 + $0x8] sm:$0xff] %v26
    // Predicated region
    $region10: #{tpu_custom_call.1} parent=1 // pred_check
      _
    $region11: #{tpu_custom_call.1} parent=1 // pred_check_branch
      %30 = sbr.rel (0) target = $region13
    $region12: #{tpu_custom_call.1} parent=1 // pred_region
      %s32 = ssub.s32 256, 256
      %33 = vsyncadd [#allocation4], %s32
      %s34 = sshll.u32 [#allocation5], 4
      %s35 = int_to_ptr.vmem [resolvable:$true] %s34
      %40 = dma.vmem_to_hbm [thread:$0]  %s35, 256, %s1, [#allocation4], 128, 128, 8
    $region13: #{tpu_custom_call.1} parent=1 // pred_fallthru
      _
    // Predicated region
    $region14: #{tpu_custom_call.1} parent=1 // pred_check
      _
    $region15: #{tpu_custom_call.1} parent=1 // pred_check_branch
      %42 = sbr.rel (0) target = $region17
    $region16: #{tpu_custom_call.1} parent=1 // pred_region
      %43 = dma.done [#allocation4], 256
    $region17: #{tpu_custom_call.1} parent=1 // pred_fallthru
      _
    %44 = vsyncpa [#allocation3], 1
    %45 = vsyncpa [#allocation4], 1

</llo_original>
